<compile_context>
chip_gen: v7x
topology: tpu7x:2x2x1
jax: 0.10.0
libtpu: 0.0.40
codegen_flags: <defaults>
</compile_context>

<pallas_src>
import functools
import math

import jax
import jax.numpy as jnp
from jax.experimental import pallas as pl
from jax.experimental.pallas import tpu as pltpu


# ------------------------- VMEM budgets (per-gen) --------------------------- #
@functools.lru_cache(maxsize=None)
def _vmem_budgets():
    """Returns (vmem_limit_bytes, tile_budget_bytes)."""
    vmem = 64 * 1024 * 1024
    try:
        vmem = int(pltpu.get_tpu_info().vmem_capacity_bytes)
    except Exception:
        pass
    # v7x: 64 MiB VMEM/TC -> 48 MiB limit; v5e/v6e: 128 MiB -> 64 MiB limit.
    vmem_limit = min((vmem * 3) // 4, 64 * 1024 * 1024)
    tile_budget = vmem_limit // 2          # 2x headroom over the VMEM model
    return vmem_limit, tile_budget


# ------------------------------ tile sizing -------------------------------- #
def _round_tile(t, total, unit):
    t = max(1, min(int(t), int(total)))
    if t >= total:
        return int(total)
    t = (t // unit) * unit
    return t if t >= unit else min(unit, int(total))


def _pick_rows_tile(rows, width, itemsize, budget, rows_tile=None):
    if rows_tile is not None:
        return _round_tile(rows_tile, rows, 8)
    # VMEM per block-row ~= double-buffered in + out DMA blocks (itemsize each)
    # plus ~3 live f32 temporaries inside the kernel body.
    per_row = max(1, width * (4 * itemsize + 12))
    tm = _round_tile(budget // per_row, rows, 8)
    if tm >= rows and rows > 8:
        # keep >= 2 grid steps so v7x's two TensorCores both get work
        tm = _round_tile(-(-rows // 2), rows, 8)
    return tm


# ----------------------------- channels_last ------------------------------- #
def _affine_store(o_ref, y, w_ref, b_ref):
    # mean/var were computed in f32; do the affine epilogue in bf16 when the
    # output is bf16 (halves VALU cost of the epilogue on v6e/v7x).
    if o_ref.dtype == jnp.bfloat16:
        o_ref[...] = (y.astype(jnp.bfloat16) * w_ref[...].astype(jnp.bfloat16)
                      + b_ref[...].astype(jnp.bfloat16))
    else:
        o_ref[...] = (y * w_ref[...].astype(jnp.float32)
                      + b_ref[...].astype(jnp.float32)).astype(o_ref.dtype)


def _ln_cl_kernel(x_ref, w_ref, b_ref, o_ref, *, eps, inv_n):
    # x_ref/o_ref: (TM, C)   w_ref/b_ref: (1, C)
    x = x_ref[...].astype(jnp.float32)
    mean = jnp.sum(x, axis=-1, keepdims=True) * inv_n
    xc = x - mean
    var = jnp.sum(xc * xc, axis=-1, keepdims=True) * inv_n
    y = xc * jax.lax.rsqrt(var + eps)
    _affine_store(o_ref, y, w_ref, b_ref)


def _ln_cl_packed_kernel(x_ref, m_ref, w_ref, b_ref, o_ref, *, eps):
    # x_ref/o_ref: (TM, L) with g = L//C logical rows packed along the lanes.
    # m_ref: (L, L) block-diagonal averaging matrix (1/C within each segment).
    # Segmented mean/var via the (otherwise idle) MXU keeps everything
    # lane-dense; precision=HIGHEST keeps f32 accuracy for the reductions.
    x = x_ref[...].astype(jnp.float32)
    m = m_ref[...]
    mean = jnp.dot(x, m, preferred_element_type=jnp.float32,
                   precision=jax.lax.Precision.HIGHEST)
    xc = x - mean
    var = jnp.dot(xc * xc, m, preferred_element_type=jnp.float32,
                  precision=jax.lax.Precision.HIGHEST)
    y = xc * jax.lax.rsqrt(var + eps)
    _affine_store(o_ref, y, w_ref, b_ref)


def layer_norm_channels_last(x, weight, bias, eps=1e-6, rows_tile=None):
    """x: (..., C); normalizes over the last dim (== F.layer_norm)."""
    orig_shape = x.shape
    C = int(orig_shape[-1])
    rows = int(math.prod(orig_shape[:-1])) if len(orig_shape) > 1 else 1
    itemsize = jnp.dtype(x.dtype).itemsize
    vmem_limit, budget = _vmem_budgets()
    params = pltpu.CompilerParams(dimension_semantics=("parallel",),
                                  vmem_limit_bytes=vmem_limit)
    weight = weight.reshape(-1)
    bias = bias.reshape(-1)

    # Lane-packed small-C path: pack g = 128 // C rows per lane group so
    # vregs / DMAs / stores stay lane-dense (narrow masked stores are the
    # single biggest measured lever). Works for any C with g >= 2; ragged row
    # counts get a tiny row pad instead of falling back to the general path.
    g = (128 // C) if C < 128 else 1
    if g >= 2:
        L = g * C
        pad_rows = (-rows) % g
        x2 = x.reshape(rows, C)
        if pad_rows:
            # Pad copies the array once; only hit when rows % g != 0 and still
            # cheaper than the masked-narrow-store general path for small C.
            x2 = jnp.pad(x2, ((0, pad_rows), (0, 0)))
        rp = (rows + pad_rows) // g
        xp = x2.reshape(rp, L)
        tm = _pick_rows_tile(rp, L, itemsize, budget, rows_tile)
        seg = jnp.arange(L, dtype=jnp.int32) // C
        m = (seg[:, None] == seg[None, :]).astype(jnp.float32) * (1.0 / C)
        wp = jnp.tile(weight, g).reshape(1, L)
        bp = jnp.tile(bias, g).reshape(1, L)
        out = pl.pallas_call(
            functools.partial(_ln_cl_packed_kernel, eps=eps),
            out_shape=jax.ShapeDtypeStruct((rp, L), x.dtype),
            grid_spec=pltpu.PrefetchScalarGridSpec(
                num_scalar_prefetch=0,
                grid=(pl.cdiv(rp, tm),),           # ragged last block is OK
                in_specs=[
                    pl.BlockSpec((tm, L), lambda i: (i, 0)),
                    pl.BlockSpec((L, L), lambda i: (0, 0)),
                    pl.BlockSpec((1, L), lambda i: (0, 0)),
                    pl.BlockSpec((1, L), lambda i: (0, 0)),
                ],
                out_specs=pl.BlockSpec((tm, L), lambda i: (i, 0)),
            ),
            compiler_params=params,
        )(xp, m, wp, bp)
        out = out.reshape(rp * g, C)
        if pad_rows:
            out = out[:rows]
        return out.reshape(orig_shape)

    # General path: tile rows, reduce over the lane axis. No host-side pad:
    # pl.cdiv grid + ragged last block (padded reads, masked writes).
    x2 = x.reshape(rows, C)
    tm = _pick_rows_tile(rows, C, itemsize, budget, rows_tile)
    out = pl.pallas_call(
        functools.partial(_ln_cl_kernel, eps=eps, inv_n=1.0 / C),
        out_shape=jax.ShapeDtypeStruct((rows, C), x.dtype),
        grid_spec=pltpu.PrefetchScalarGridSpec(
            num_scalar_prefetch=0,
            grid=(pl.cdiv(rows, tm),),
            in_specs=[
                pl.BlockSpec((tm, C), lambda i: (i, 0)),
                pl.BlockSpec((1, C), lambda i: (0, 0)),
                pl.BlockSpec((1, C), lambda i: (0, 0)),
            ],
            out_specs=pl.BlockSpec((tm, C), lambda i: (i, 0)),
        ),
        compiler_params=params,
    )(x2, weight.reshape(1, C), bias.reshape(1, C))
    return out.reshape(orig_shape)


# ----------------------------- channels_first ------------------------------ #
def _ln_cf_kernel(x_ref, w_ref, b_ref, o_ref, *, eps, inv_c):
    # x_ref/o_ref: (TB, C, TS)   w_ref/b_ref: (C, 1)
    x = x_ref[...].astype(jnp.float32)
    mean = jnp.sum(x, axis=1, keepdims=True) * inv_c     # (TB, 1, TS)
    xc = x - mean
    var = jnp.sum(xc * xc, axis=1, keepdims=True) * inv_c
    y = xc * jax.lax.rsqrt(var + eps)
    if o_ref.dtype == jnp.bfloat16:
        w = w_ref[...].astype(jnp.bfloat16)[None]         # (1, C, 1)
        b = b_ref[...].astype(jnp.bfloat16)[None]
        o_ref[...] = w * y.astype(jnp.bfloat16) + b
    else:
        w = w_ref[...].astype(jnp.float32)[None]
        b = b_ref[...].astype(jnp.float32)[None]
        o_ref[...] = (w * y + b).astype(o_ref.dtype)


def layer_norm_channels_first(x, weight, bias, eps=1e-6,
                              spatial_tile=None, batch_tile=None):
    """x: (B, C, H, W); normalizes over the channel axis (dim 1)."""
    B, C, H, W = x.shape
    HW = H * W
    x3 = x.reshape(B, C, HW)          # lane axis = H*W (lane-dense, not W)
    itemsize = jnp.dtype(x.dtype).itemsize
    vmem_limit, budget = _vmem_budgets()
    # VMEM per spatial element per image: in/out double buffers + f32 temps.
    per_elem = max(1, C * (4 * itemsize + 12))
    elems = max(128, budget // per_elem)        # TB * TS elements per block
    ts = (_round_tile(min(elems, HW), HW, 128) if spatial_tile is None
          else _round_tile(spatial_tile, HW, 128))
    tb = (max(1, min(B, elems // max(ts, 1))) if batch_tile is None
          else max(1, min(int(batch_tile), B)))
    if spatial_tile is None and batch_tile is None:
        # keep >= 2 grid steps so v7x's two TensorCores both get work
        if tb >= B and ts >= HW:
            if B >= 2:
                tb = -(-B // 2)
            elif HW > 128:
                ts = _round_tile(-(-HW // 2), HW, 128)
    out = pl.pallas_call(
        functools.partial(_ln_cf_kernel, eps=eps, inv_c=1.0 / C),
        out_shape=jax.ShapeDtypeStruct((B, C, HW), x.dtype),
        grid_spec=pltpu.PrefetchScalarGridSpec(
            num_scalar_prefetch=0,
            grid=(pl.cdiv(B, tb), pl.cdiv(HW, ts)),   # ragged tiles OK
            in_specs=[
                pl.BlockSpec((tb, C, ts), lambda b, s: (b, 0, s)),
                pl.BlockSpec((C, 1), lambda b, s: (0, 0)),
                pl.BlockSpec((C, 1), lambda b, s: (0, 0)),
            ],
            out_specs=pl.BlockSpec((tb, C, ts), lambda b, s: (b, 0, s)),
        ),
        compiler_params=pltpu.CompilerParams(
            dimension_semantics=("parallel", "parallel"),
            vmem_limit_bytes=vmem_limit),
    )(x3, weight.reshape(C, 1), bias.reshape(C, 1))
    return out.reshape(B, C, H, W)


# ---------------------------- reference (JAX) ------------------------------ #
def _ref_cl(x, w, b, eps):
    x = x.astype(jnp.float32)
    mean = jnp.mean(x, axis=-1, keepdims=True)
    var = jnp.mean((x - mean) ** 2, axis=-1, keepdims=True)
    return (x - mean) / jnp.sqrt(var + eps) * w.astype(jnp.float32) \
        + b.astype(jnp.float32)


def _ref_cf(x, w, b, eps):
    x = x.astype(jnp.float32)
    mean = jnp.mean(x, axis=1, keepdims=True)
    var = jnp.mean((x - mean) ** 2, axis=1, keepdims=True)
    y = (x - mean) / jnp.sqrt(var + eps)
    return (w.astype(jnp.float32)[None, :, None, None] * y
            + b.astype(jnp.float32)[None, :, None, None])


def _check(out, ref, atol, rtol, name):
    ok = jnp.allclose(out.astype(jnp.float32), ref, atol=atol, rtol=rtol)
    assert bool(ok), f"mismatch in {name}"


if __name__ == "__main__":
    key = jax.random.PRNGKey(0)
    eps = 1e-6                     # module default (torch default would be 1e-5)
    k1, k2, k3, k4, k5 = jax.random.split(key, 5)

    # 1) channels_first: NCHW, normalized over C=4 (module's default params).
    x_cf = jax.random.normal(k1, (2, 4, 16, 16), dtype=jnp.float32)
    w_cf = jnp.ones((4,), jnp.float32)
    b_cf = jnp.zeros((4,), jnp.float32)
    out_cf = jax.block_until_ready(
        layer_norm_channels_first(x_cf, w_cf, b_cf, eps=eps))
    _check(out_cf, _ref_cf(x_cf, w_cf, b_cf, eps), 1e-5, 1e-5, "cf")

    # 2) channels_last: NHWC, C=32 — lane-packed small-C path, auto tiles.
    x_cl = jax.random.normal(k2, (2, 16, 16, 32), dtype=jnp.float32)
    w_cl = jnp.ones((32,), jnp.float32)
    b_cl = jnp.zeros((32,), jnp.float32)
    out_cl = jax.block_until_ready(
        layer_norm_channels_last(x_cl, w_cl, b_cl, eps=eps))
    _check(out_cl, _ref_cl(x_cl, w_cl, b_cl, eps), 1e-5, 1e-5, "cl packed")

    # 3) channels_last general path (C >= 128), ragged last row tile.
    x_g = jax.random.normal(k3, (2, 5, 16, 256), dtype=jnp.float32)
    w_g = 1.0 + 0.1 * jax.random.normal(k4, (256,), dtype=jnp.float32)
    b_g = 0.1 * jax.random.normal(k5, (256,), dtype=jnp.float32)
    out_g = jax.block_until_ready(
        layer_norm_channels_last(x_g, w_g, b_g, eps=eps, rows_tile=64))
    _check(out_g, _ref_cl(x_g, w_g, b_g, eps), 1e-5, 1e-5, "cl general")

    # 4) channels_first with a ragged spatial tile (HW=200, tile=128).
    x_r = jax.random.normal(k5, (2, 4, 10, 20), dtype=jnp.float32)
    w_r = 1.0 + 0.1 * jax.random.normal(k3, (4,), dtype=jnp.float32)
    b_r = 0.1 * jax.random.normal(k4, (4,), dtype=jnp.float32)
    out_r = jax.block_until_ready(
        layer_norm_channels_first(x_r, w_r, b_r, eps=eps, spatial_tile=128))
    _check(out_r, _ref_cf(x_r, w_r, b_r, eps), 1e-5, 1e-5, "cf ragged")

    # 5) packed path with rows % g != 0 (row pad) and a ragged row tile.
    x_p = jax.random.normal(k1, (3, 5, 7, 32), dtype=jnp.float32)
    w_p = 1.0 + 0.1 * jax.random.normal(k2, (32,), dtype=jnp.float32)
    b_p = 0.1 * jax.random.normal(k5, (32,), dtype=jnp.float32)
    out_p = jax.block_until_ready(
        layer_norm_channels_last(x_p, w_p, b_p, eps=eps, rows_tile=16))
    _check(out_p, _ref_cl(x_p, w_p, b_p, eps), 1e-5, 1e-5, "cl packed pad")

    # 6) packed path with non-power-of-two C=48 (g=2, 96 lanes used).
    x_n = jax.random.normal(k4, (2, 4, 8, 48), dtype=jnp.float32)
    w_n = 1.0 + 0.1 * jax.random.normal(k1, (48,), dtype=jnp.float32)
    b_n = 0.1 * jax.random.normal(k2, (48,), dtype=jnp.float32)
    out_n = jax.block_until_ready(
        layer_norm_channels_last(x_n, w_n, b_n, eps=eps))
    _check(out_n, _ref_cl(x_n, w_n, b_n, eps), 1e-5, 1e-5, "cl packed c48")

    # 7) bf16 inputs/outputs (bf16 affine epilogue): general, packed, cf.
    xb_g = jax.random.normal(k2, (2, 8, 8, 128), dtype=jnp.bfloat16)
    wb_g = jnp.ones((128,), jnp.float32)
    bb_g = jnp.zeros((128,), jnp.float32)
    outb_g = jax.block_until_ready(
        layer_norm_channels_last(xb_g, wb_g, bb_g, eps=eps))
    _check(outb_g, _ref_cl(xb_g, wb_g, bb_g, eps), 5e-2, 5e-2, "cl bf16")

    xb_p = jax.random.normal(k3, (2, 8, 8, 32), dtype=jnp.bfloat16)
    outb_p = jax.block_until_ready(
        layer_norm_channels_last(xb_p, w_cl, b_cl, eps=eps))
    _check(outb_p, _ref_cl(xb_p, w_cl, b_cl, eps), 5e-2, 5e-2, "cl packed bf16")

    xb_c = jax.random.normal(k4, (2, 4, 12, 12), dtype=jnp.bfloat16)
    outb_c = jax.block_until_ready(
        layer_norm_channels_first(xb_c, w_cf, b_cf, eps=eps))
    _check(outb_c, _ref_cf(xb_c, w_cf, b_cf, eps), 5e-2, 5e-2, "cf bf16")

    print("KERNEL_OK")
</pallas_src>

<mosaic_0001>
module attributes {stable_mosaic.version = 11 : i64} {
  func.func @_ln_cf_kernel(%arg0: i32, %arg1: i32, %arg2: memref<1x4x256xf32, #tpu.memory_space<vmem>>, %arg3: memref<4x1xf32, #tpu.memory_space<vmem>>, %arg4: memref<4x1xf32, #tpu.memory_space<vmem>>, %arg5: memref<1x4x256xf32, #tpu.memory_space<vmem>>) attributes {dimension_semantics = [#tpu.dimension_semantics<parallel>, #tpu.dimension_semantics<parallel>], iteration_bounds = array<i64: 2, 1>, scalar_prefetch = 0 : i64, scratch_operands = 0 : i64, tpu.core_type = #tpu.core_type<tc>, window_params = [{transform_indices = @transform_0, window_bounds = array<i64: 1, 4, 256>}, {pipeline_mode = #tpu.pipeline_mode<synchronous>, transform_indices = @transform_1, window_bounds = array<i64: 4, 1>}, {pipeline_mode = #tpu.pipeline_mode<synchronous>, transform_indices = @transform_2, window_bounds = array<i64: 4, 1>}, {transform_indices = @transform_3, window_bounds = array<i64: 1, 4, 256>}]} {
    %c0 = arith.constant 0 : index
    %c0_0 = arith.constant 0 : index
    %c0_1 = arith.constant 0 : index
    %0 = vector.load %arg2[%c0, %c0_0, %c0_1] : memref<1x4x256xf32, #tpu.memory_space<vmem>>, vector<1x4x256xf32>
    %cst = arith.constant dense<0.000000e+00> : vector<1x256xf32>
    %1 = vector.multi_reduction <add>, %0, %cst [1] : vector<1x4x256xf32> to vector<1x256xf32>
    %2 = vector.shape_cast %1 : vector<1x256xf32> to vector<1x1x256xf32>
    %cst_2 = arith.constant 2.500000e-01 : f32
    %3 = vector.broadcast %cst_2 : f32 to vector<1x1x256xf32>
    %4 = arith.mulf %2, %3 : vector<1x1x256xf32>
    %5 = vector.broadcast %4 : vector<1x1x256xf32> to vector<1x4x256xf32>
    %6 = arith.subf %0, %5 : vector<1x4x256xf32>
    %7 = arith.mulf %6, %6 : vector<1x4x256xf32>
    %cst_3 = arith.constant dense<0.000000e+00> : vector<1x256xf32>
    %8 = vector.multi_reduction <add>, %7, %cst_3 [1] : vector<1x4x256xf32> to vector<1x256xf32>
    %9 = vector.shape_cast %8 : vector<1x256xf32> to vector<1x1x256xf32>
    %cst_4 = arith.constant 2.500000e-01 : f32
    %10 = vector.broadcast %cst_4 : f32 to vector<1x1x256xf32>
    %11 = arith.mulf %9, %10 : vector<1x1x256xf32>
    %cst_5 = arith.constant 9.99999997E-7 : f32
    %12 = vector.broadcast %cst_5 : f32 to vector<1x1x256xf32>
    %13 = arith.addf %11, %12 : vector<1x1x256xf32>
    %14 = math.rsqrt %13 : vector<1x1x256xf32>
    %15 = vector.broadcast %14 : vector<1x1x256xf32> to vector<1x4x256xf32>
    %16 = arith.mulf %6, %15 : vector<1x4x256xf32>
    %c0_6 = arith.constant 0 : index
    %c0_7 = arith.constant 0 : index
    %17 = vector.load %arg3[%c0_6, %c0_7] : memref<4x1xf32, #tpu.memory_space<vmem>>, vector<4x1xf32>
    %18 = vector.shape_cast %17 : vector<4x1xf32> to vector<1x4x1xf32>
    %c0_8 = arith.constant 0 : index
    %c0_9 = arith.constant 0 : index
    %19 = vector.load %arg4[%c0_8, %c0_9] : memref<4x1xf32, #tpu.memory_space<vmem>>, vector<4x1xf32>
    %20 = vector.shape_cast %19 : vector<4x1xf32> to vector<1x4x1xf32>
    %21 = vector.broadcast %18 : vector<1x4x1xf32> to vector<1x4x256xf32>
    %22 = arith.mulf %21, %16 : vector<1x4x256xf32>
    %23 = vector.broadcast %20 : vector<1x4x1xf32> to vector<1x4x256xf32>
    %24 = arith.addf %22, %23 : vector<1x4x256xf32>
    %c0_10 = arith.constant 0 : index
    %c0_11 = arith.constant 0 : index
    %c0_12 = arith.constant 0 : index
    %25 = vector.load %arg5[%c0_10, %c0_11, %c0_12] : memref<1x4x256xf32, #tpu.memory_space<vmem>>, vector<1x4x256xf32>
    tpu.vector_store %arg5[%c0_10, %c0_11, %c0_12], %24 {strides = array<i32>} : memref<1x4x256xf32, #tpu.memory_space<vmem>>, vector<1x4x256xf32>,
    return
  }
  func.func @transform_0(%arg0: i32, %arg1: i32) -> (i32, i32, i32) {
    %c0_i32 = arith.constant 0 : i32
    %c0_i32_0 = arith.constant 0 : i32
    return %arg0, %c0_i32, %arg1 : i32, i32, i32
  }
  func.func @transform_1(%arg0: i32, %arg1: i32) -> (i32, i32) {
    %c0_i32 = arith.constant 0 : i32
    %c0_i32_0 = arith.constant 0 : i32
    %c0_i32_1 = arith.constant 0 : i32
    return %c0_i32, %c0_i32_0 : i32, i32
  }
  func.func @transform_2(%arg0: i32, %arg1: i32) -> (i32, i32) {
    %c0_i32 = arith.constant 0 : i32
    %c0_i32_0 = arith.constant 0 : i32
    %c0_i32_1 = arith.constant 0 : i32
    return %c0_i32, %c0_i32_0 : i32, i32
  }
  func.func @transform_3(%arg0: i32, %arg1: i32) -> (i32, i32, i32) {
    %c0_i32 = arith.constant 0 : i32
    %c0_i32_0 = arith.constant 0 : i32
    return %arg0, %c0_i32, %arg1 : i32, i32, i32
  }
}

</mosaic_0001>

<llo_original>
// kernel: tpu_custom_call.1
$region0: #{tpu_custom_call.1}
  #allocation0 [shape = 'u32[]', space=smem, size = 0x4, offset = 0x4, fixed_abs, tag = 'smem constant byte address 0x4 - core index']
  #allocation1 [shape = 'u32[144,128]{1,0:T(1,128)}', space=vmem, size = 0x12000, scoped, tag = 'internal scratch']
  %s0 = inlined_call_operand.hbm [shape: f32[2,4,256], index: 0, kind: input, shape index: {}]
  %s1 = inlined_call_operand.vmem [shape: f32[4,1], index: 1, kind: input, shape index: {}]
  %s2 = inlined_call_operand.vmem [shape: f32[4,1], index: 2, kind: input, shape index: {}]
  %s3 = inlined_call_operand.hbm [shape: f32[2,4,256], index: 3, kind: output, shape index: {}]
  %s4 = sld [smem:[#allocation0]]
  $region49: #{tpu_custom_call.1} parent=0
    _
  %s6 = ssub.s32 1, %s4
  %s7 = scalar_select 0, %s6, %s4
  $region1: #{tpu_custom_call.1} parent=0
    #allocation2 [shape = 'u8[8192]{0}', space=vmem, size = 0x2000, scoped, tag = 'input window, operand 0']
    #allocation3 [shape = 's32[2]{0}', space=sflag, size = 0x8, scoped, tag = 'scoped memory for tpu_custom_call.1']
    #allocation4 [shape = 's32[2]{0}', space=sflag, size = 0x8, scoped, tag = 'scoped memory for tpu_custom_call.1']
    #allocation5 [shape = 'u8[8192]{0}', space=vmem, size = 0x2000, scoped, tag = 'output window, operand 0']
    %8 = vsyncpa [#allocation3], 0
    %s9 = scalar_lea.sflag [#allocation3], 1
    %10 = vsyncpa %s9, 0
    %11 = vsyncpa [#allocation4], 0
    %s12 = scalar_lea.sflag [#allocation4], 1
    %13 = vsyncpa %s12, 0
    loop: start=0, step=1, limit=4
    $region2: #{tpu_custom_call.1} parent=1 // loop_pre_header
      _
    $region3: #{tpu_custom_call.1} parent=1 // loop_header
      %s15 = sphi 0, %s19
      %p16 = scmp.ge.s32.totalorder %s15, 4
      %s22 = sphi 0, %s34
      %s23 = sphi 0, %s30
      %s24 = sphi 0, %s22
      %s25 = sphi 0, %s23
      %s26 = sphi 0, %s24
      %s27 = sphi 0, %s25
      %s39 = sphi 0, %s41
      %s42 = sphi 0, %s39
      %s43 = sphi 0, %s42
      %s59 = sphi 0, %s43
      %s63 = sphi 0, %s63
      %s65 = sphi 0, %s63
      %s66 = sphi 0, %s65
      %s80 = sphi 0, %s66
      %s84 = sphi 0, %s84
      %s86 = sphi 0, %s84
      %s87 = sphi 0, %s86
      %s101 = sphi 0, %s87
      %s109 = sphi 0, %s111
      %s112 = sphi 0, %s109
      %s113 = sphi 0, %s112
      %s129 = sphi 0, %s113
    $region4: #{tpu_custom_call.1} parent=1 // loop_header_branch
      %18 = sbr.rel (%p16) target = $region8
    $region5: #{tpu_custom_call.1} parent=1 // loop_body
      %s20 = ssub.s32 %s15, 1
      %s21 = ssub.s32 %s15, 2
      %s28 = sadd.s32 1, %s23
      %p29 = scmp.ge.s32.totalorder %s28, 1
      %s30 = scalar_select %p29, 0, %s28
      %s31 = sadd.s32 1, %s22
      %s32 = scalar_select %p29, %s31, %s22
      %p33 = scmp.ge.s32.totalorder %s32, 2
      %s34 = scalar_select %p33, 0, %s32
      %s35 = ssub.s32 %s22, %s34
      %s36 = ssub.s32 %s23, %s30
      %s37 = sor.u32 %s35, %s36
      %p38 = scmp.eq.s32.totalorder %s37, 0
      %s40 = sadd.s32 %s39, 1
      %s41 = scalar_select %p38, %s39, %s40
      %p44 = pneg %p38
      %p45 = scmp.eq.s32.totalorder %s15, 1
      %p46 = por %p44, %p45
      %p47 = scmp.ne.s32.totalorder %s39, %s42
      %p48 = scmp.eq.s32.totalorder %s15, 0
      %p49 = por %p47, %p48
      %p50 = scmp.ne.s32.totalorder %s39, %s42
      %p51 = scmp.eq.s32.totalorder %s20, 1
      %p52 = por %p50, %p51
      %p53 = scmp.ne.s32.totalorder %s42, %s43
      %p54 = scmp.eq.s32.totalorder %s20, 0
      %p55 = por %p53, %p54
      %p56 = scmp.ne.s32.totalorder %s42, %s43
      %p57 = scmp.eq.s32.totalorder %s21, 1
      %p58 = por %p56, %p57
      %p60 = scmp.ne.s32.totalorder %s43, %s59
      %p61 = scmp.eq.s32.totalorder %s21, 0
      %p62 = por %p60, %p61
      %s64 = sadd.s32 %s63, 1
      %p67 = scmp.eq.s32.totalorder %s15, 1
      %p68 = scmp.ne.s32.totalorder %s63, %s65
      %p69 = scmp.eq.s32.totalorder %s15, 0
      %p70 = por %p68, %p69
      %p71 = scmp.ne.s32.totalorder %s63, %s65
      %p72 = scmp.eq.s32.totalorder %s20, 1
      %p73 = por %p71, %p72
      %p74 = scmp.ne.s32.totalorder %s65, %s66
      %p75 = scmp.eq.s32.totalorder %s20, 0
      %p76 = por %p74, %p75
      %p77 = scmp.ne.s32.totalorder %s65, %s66
      %p78 = scmp.eq.s32.totalorder %s21, 1
      %p79 = por %p77, %p78
      %p81 = scmp.ne.s32.totalorder %s66, %s80
      %p82 = scmp.eq.s32.totalorder %s21, 0
      %p83 = por %p81, %p82
      %s85 = sadd.s32 %s84, 1
      %p88 = scmp.eq.s32.totalorder %s15, 1
      %p89 = scmp.ne.s32.totalorder %s84, %s86
      %p90 = scmp.eq.s32.totalorder %s15, 0
      %p91 = por %p89, %p90
      %p92 = scmp.ne.s32.totalorder %s84, %s86
      %p93 = scmp.eq.s32.totalorder %s20, 1
      %p94 = por %p92, %p93
      %p95 = scmp.ne.s32.totalorder %s86, %s87
      %p96 = scmp.eq.s32.totalorder %s20, 0
      %p97 = por %p95, %p96
      %p98 = scmp.ne.s32.totalorder %s86, %s87
      %p99 = scmp.eq.s32.totalorder %s21, 1
      %p100 = por %p98, %p99
      %p102 = scmp.ne.s32.totalorder %s87, %s101
      %p103 = scmp.eq.s32.totalorder %s21, 0
      %p104 = por %p102, %p103
      %s105 = ssub.s32 %s22, %s34
      %s106 = ssub.s32 %s23, %s30
      %s107 = sor.u32 %s105, %s106
      %p108 = scmp.eq.s32.totalorder %s107, 0
      %s110 = sadd.s32 %s109, 1
      %s111 = scalar_select %p108, %s109, %s110
      %p114 = pneg %p108
      %p115 = scmp.eq.s32.totalorder %s15, 1
      %p116 = por %p114, %p115
      %p117 = scmp.ne.s32.totalorder %s109, %s112
      %p118 = scmp.eq.s32.totalorder %s15, 0
      %p119 = por %p117, %p118
      %p120 = scmp.ne.s32.totalorder %s109, %s112
      %p121 = scmp.eq.s32.totalorder %s20, 1
      %p122 = por %p120, %p121
      %p123 = scmp.ne.s32.totalorder %s112, %s113
      %p124 = scmp.eq.s32.totalorder %s20, 0
      %p125 = por %p123, %p124
      %p126 = scmp.ne.s32.totalorder %s112, %s113
      %p127 = scmp.eq.s32.totalorder %s21, 1
      %p128 = por %p126, %p127
      %p130 = scmp.ne.s32.totalorder %s113, %s129
      %p131 = scmp.eq.s32.totalorder %s21, 0
      %p132 = por %p130, %p131
      %p133 = scmp.le.s32.totalorder 1, %s15
      %p134 = scmp.lt.s32.totalorder %s15, 3
      %p135 = pnand %p133, %p134
      %p136 = pneg %p135
      // Predicated region
      $region9: #{tpu_custom_call.1} parent=5 // pred_check
        _
      $region10: #{tpu_custom_call.1} parent=5 // pred_check_branch
        %138 = sbr.rel (%p135) target = $region12
      $region11: #{tpu_custom_call.1} parent=5 // pred_region
        %s139 = ssub.s32 %s15, 1
        // Predicated region
        $region13: #{tpu_custom_call.1} parent=11 // pred_check
          %p140 = pneg %p76
        $region14: #{tpu_custom_call.1} parent=11 // pred_check_branch
          %142 = sbr.rel (%p140) target = $region16
        $region15: #{tpu_custom_call.1} parent=11 // pred_region
          _
        $region16: #{tpu_custom_call.1} parent=11 // pred_fallthru
          _
        // Predicated region
        $region17: #{tpu_custom_call.1} parent=11 // pred_check
          %p143 = pneg %p97
        $region18: #{tpu_custom_call.1} parent=11 // pred_check_branch
          %145 = sbr.rel (%p143) target = $region20
        $region19: #{tpu_custom_call.1} parent=11 // pred_region
          _
        $region20: #{tpu_custom_call.1} parent=11 // pred_fallthru
          _
      $region12: #{tpu_custom_call.1} parent=5 // pred_fallthru
        _
      %p146 = scmp.lt.s32.totalorder %s15, 2
      // Predicated region
      $region21: #{tpu_custom_call.1} parent=5 // pred_check
        %p147 = pneg %p146
      $region22: #{tpu_custom_call.1} parent=5 // pred_check_branch
        %149 = sbr.rel (%p147) target = $region24
      $region23: #{tpu_custom_call.1} parent=5 // pred_region
        // Predicated region
        $region25: #{tpu_custom_call.1} parent=23 // pred_check
          %p150 = pneg %p49
        $region26: #{tpu_custom_call.1} parent=23 // pred_check_branch
          %152 = sbr.rel (%p150) target = $region28
        $region27: #{tpu_custom_call.1} parent=23 // pred_region
          %s153 = sand.u32 %s39, 1
          %s154 = scalar_lea.sflag [#allocation3], %s153
          %s155 = sand.u32 %s39, 1
          %s156 = smul.addr %s155, 8
          %s157 = scalar_lea.vmem [#allocation2], %s156
          %s158 = smul.u32 2, %s23
          %s160 = ssub.s32 128, 128
          %161 = vsyncadd %s154, %s160
          %s162 = smul.addr %s22, 2
          %s163 = sadd.s32 %s158, %s162
          %s164 = smul.addr %s163, 64
          %s165 = scalar_lea.hbm %s0, %s164
          %s167 = sshll.u32 %s157, 4
          %s168 = int_to_ptr.vmem [resolvable:$true] %s167
          %170 = dma.hbm_to_vmem [thread:$0]  %s165, 128, %s168, %s154
        $region28: #{tpu_custom_call.1} parent=23 // pred_fallthru
          _
      $region24: #{tpu_custom_call.1} parent=5 // pred_fallthru
        _
      %p171 = scmp.le.s32.totalorder 1, %s15
      %p172 = scmp.lt.s32.totalorder %s15, 3
      %p173 = pnand %p171, %p172
      %p174 = pneg %p173
      // Predicated region
      $region29: #{tpu_custom_call.1} parent=5 // pred_check
        _
      $region30: #{tpu_custom_call.1} parent=5 // pred_check_branch
        %176 = sbr.rel (%p173) target = $region32
      $region31: #{tpu_custom_call.1} parent=5 // pred_region
        %s177 = ssub.s32 %s15, 1
        %s178 = sand.u32 %s42, 1
        %s179 = scalar_lea.sflag [#allocation3], %s178
        %s180 = sand.u32 %s42, 1
        %s181 = smul.addr %s180, 8
        %s182 = scalar_lea.vmem [#allocation2], %s181
        // Predicated region
        $region33: #{tpu_custom_call.1} parent=31 // pred_check
          %p183 = pneg %p55
        $region34: #{tpu_custom_call.1} parent=31 // pred_check_branch
          %185 = sbr.rel (%p183) target = $region36
        $region35: #{tpu_custom_call.1} parent=31 // pred_region
          %186 = dma.done %s179, 128
        $region36: #{tpu_custom_call.1} parent=31 // pred_fallthru
          _
        %s187 = sand.u32 %s42, 1
        %s188 = scalar_lea.sflag [#allocation3], %s187
        %s189 = sand.u32 %s42, 1
        %s190 = smul.addr %s189, 8
        %s191 = scalar_lea.vmem [#allocation2], %s190
        %p192 = pneg %p55
        %p193 = pneg %p52
        %p194 = pneg %p76
        %p195 = pneg %p73
        %p196 = pneg %p97
        %p197 = pneg %p94
        %p198 = pneg %p125
        %p199 = pneg %p122
        %s200 = sand.u32 %s112, 1
        %s201 = scalar_lea.sflag [#allocation4], %s200
        %s202 = sand.u32 %s112, 1
        %s203 = smul.addr %s202, 8
        %s204 = scalar_lea.vmem [#allocation5], %s203
        %s205 = smul.u32 2, %s25
        %s206 = smul.u32 2, %s25
        %v207 = vld [vmem:[%s182] sm:$0xff]
        %v209 = vcombine.high %v207, %v207
        %vm211 = vcmask 1043456
        %v212 = vsel %vm211, %v207, 0.0
        %v213 = vrot.slane %v212, 4
        %v214 = vadd.f32 %v212, %v213
        %v215 = vrot.slane %v214, 2
        %v216 = vadd.f32 %v214, %v215
        %v217 = vrot.slane %v216, 1
        %v218 = vadd.f32 %v216, %v217
        %v219 = vsel %vm211, %v209, 0.0
        %v220 = vrot.slane %v219, 4
        %v221 = vadd.f32 %v219, %v220
        %v222 = vrot.slane %v221, 2
        %v223 = vadd.f32 %v221, %v222
        %v224 = vrot.slane %v223, 1
        %v225 = vadd.f32 %v223, %v224
        %v226 = vmul.f32 %v218, 0.25
        %v227 = vmul.f32 %v225, 0.25
        %v230 = vcombine.low %v226, %v227
        %v232 = vsub.f32 %v207, %v230
        %v233 = vmul.f32 %v232, %v232
        %v235 = vcombine.high %v233, %v233
        %v237 = vsel %vm211, %v233, 0.0
        %v238 = vrot.slane %v237, 4
        %v239 = vadd.f32 %v237, %v238
        %v240 = vrot.slane %v239, 2
        %v241 = vadd.f32 %v239, %v240
        %v242 = vrot.slane %v241, 1
        %v243 = vadd.f32 %v241, %v242
        %v244 = vsel %vm211, %v235, 0.0
        %v245 = vrot.slane %v244, 4
        %v246 = vadd.f32 %v244, %v245
        %v247 = vrot.slane %v246, 2
        %v248 = vadd.f32 %v246, %v247
        %v249 = vrot.slane %v248, 1
        %v250 = vadd.f32 %v248, %v249
        %v251 = vmul.f32 %v243, 0.25
        %v252 = vmul.f32 %v250, 0.25
        %v253 = vadd.f32 %v251, 1e-06
        %v254 = vadd.f32 %v252, 1e-06
        %v255 = vrsqrt.pop %v253
        %v256 = vrsqrt.pop %v254
        %v259 = vcombine.low %v255, %v256
        %v261 = vmul.f32 %v232, %v259
        %v262 = vld [vmem:[%s1] sm:$0xf]
        %v263 = vld [vmem:[%s2] sm:$0xf]
        %265 = vset.pattern.permute.xlu0 0
        %266 = vperm.xlu0 %265, %v262
        %v267 = vpop.permute.xlu0 %266
        %v270 = vcombine.high %v261, %v261
        %v272 = vmul.f32 %v267, %v261
        %v273 = vmul.f32 %v267, %v270
        %275 = vset.pattern.permute.xlu0 0
        %276 = vperm.xlu0 %275, %v263
        %v277 = vpop.permute.xlu0 %276
        %v279 = vadd.f32 %v272, %v277
        %v280 = vadd.f32 %v273, %v277
        %v283 = vcombine.low %v279, %v280
        %285 = vst [vmem:[%s204] sm:$0xff] %v283
        %s286 = sand.u32 %s112, 1
        %s287 = scalar_lea.sflag [#allocation4], %s286
        %s288 = sand.u32 %s112, 1
        %s289 = smul.addr %s288, 8
        %s290 = scalar_lea.vmem [#allocation5], %s289
        // Predicated region
        $region37: #{tpu_custom_call.1} parent=31 // pred_check
          %p291 = pneg %p122
        $region38: #{tpu_custom_call.1} parent=31 // pred_check_branch
          %293 = sbr.rel (%p291) target = $region40
        $region39: #{tpu_custom_call.1} parent=31 // pred_region
          %s294 = smul.u32 2, %s25
          %s296 = ssub.s32 128, 128
          %297 = vsyncadd %s287, %s296
          %s298 = smul.addr %s24, 2
          %s299 = sadd.s32 %s294, %s298
          %s300 = smul.addr %s299, 64
          %s301 = scalar_lea.hbm %s3, %s300
          %s303 = sshll.u32 %s290, 4
          %s304 = int_to_ptr.vmem [resolvable:$true] %s303
          %306 = dma.vmem_to_hbm [thread:$0]  %s304, 128, %s301, %s287
        $region40: #{tpu_custom_call.1} parent=31 // pred_fallthru
          _
      $region32: #{tpu_custom_call.1} parent=5 // pred_fallthru
        _
      %p307 = scmp.le.s32.totalorder 2, %s15
      // Predicated region
      $region41: #{tpu_custom_call.1} parent=5 // pred_check
        %p308 = pneg %p307
      $region42: #{tpu_custom_call.1} parent=5 // pred_check_branch
        %310 = sbr.rel (%p308) target = $region44
      $region43: #{tpu_custom_call.1} parent=5 // pred_region
        %s311 = ssub.s32 %s15, 2
        // Predicated region
        $region45: #{tpu_custom_call.1} parent=43 // pred_check
          %p312 = pneg %p128
        $region46: #{tpu_custom_call.1} parent=43 // pred_check_branch
          %314 = sbr.rel (%p312) target = $region48
        $region47: #{tpu_custom_call.1} parent=43 // pred_region
          %s315 = sand.u32 %s113, 1
          %s316 = scalar_lea.sflag [#allocation4], %s315
          %s317 = sand.u32 %s113, 1
          %s318 = smul.addr %s317, 8
          %s319 = scalar_lea.vmem [#allocation5], %s318
          %320 = dma.done %s316, 128
        $region48: #{tpu_custom_call.1} parent=43 // pred_fallthru
          _
      $region44: #{tpu_custom_call.1} parent=5 // pred_fallthru
        _
    $region6: #{tpu_custom_call.1} parent=1 // loop_footer
      %s19 = sadd.s32 1, %s15
    $region7: #{tpu_custom_call.1} parent=1 // loop_footer_branch
      %14 = sbr.rel target = $region3
    $region8: #{tpu_custom_call.1} parent=1 // loop_exit
      _
    %321 = vsyncpa [#allocation3], 1
    %s322 = scalar_lea.sflag [#allocation3], 1
    %323 = vsyncpa %s322, 1
    %324 = vsyncpa [#allocation4], 1
    %s325 = scalar_lea.sflag [#allocation4], 1
    %326 = vsyncpa %s325, 1

</llo_original>
